<compile_context>
chip_gen: v7x
topology: tpu7x:2x2x1
jax: 0.10.0
libtpu: 0.0.40
codegen_flags: <defaults>
</compile_context>

<pallas_src>
import math

import jax
import jax.numpy as jnp
import numpy as np
from jax.experimental import pallas as pl
from jax.experimental.pallas import tpu as pltpu

MATMUL_DTYPE = jnp.bfloat16   # MXU-native on v5e/v6e/v7x; accumulation stays f32
GI_DTYPE = jnp.bfloat16       # dtype of the x @ W_ih intermediate round-tripped to HBM
F32 = 4
UNROLL = 8                    # cap on the per-timestep unroll (register pressure)


# ----------------------------- VMEM budgeting helpers -------------------------------
def _physical_vmem_bytes():
    """Best-effort physical VMEM per TensorCore (trace-time query, safe fallback)."""
    try:
        info = pltpu.get_tpu_info()
        for name in ("vmem_capacity_bytes", "vmem_size_bytes", "vmem_bytes"):
            v = getattr(info, name, None)
            if v:
                return int(v)
    except Exception:
        pass
    return 64 << 20           # conservative: v7x per-core VMEM


def _vmem_cap():
    phys = _physical_vmem_bytes()
    # leave ~8 MiB for compiler-internal scratch; never request more than ~100 MiB
    return max(min(phys - (8 << 20), 100 << 20), 32 << 20)


def _vmem_limit(nbytes, cap):
    return int(min(max(2 * int(nbytes) + (4 << 20), 32 << 20), cap))


def _proj_vmem_bytes(rm, D, H, gi_isz, w_isz):
    return (2 * rm * D * F32                  # x input blocks (double-buffered)
            + 2 * 2 * rm * 3 * H * gi_isz     # stacked gi output block (2 dirs, 2 bufs)
            + D * 6 * H * w_isz               # resident fused W_ih
            + 6 * H * F32 + 2 * D * F32)      # fused b_ih + gamma/beta


def _rec_vmem_bytes(tt, B, H, gi_isz, w_isz):
    return (2 * tt * B * 3 * H * gi_isz       # gi blocks (one dir per program, 2 bufs)
            + 2 * tt * B * H * F32            # output blocks (2 bufs)
            + 2 * H * 3 * H * w_isz           # W_hh blocks (2 bufs of one direction)
            + 2 * 3 * H * F32                 # b_hh
            + 2 * B * H * F32)                # carried hidden-state scratch (2, B, H)


# ----------------------------------- kernels ----------------------------------------
def _ln_gelu(x, gamma, beta):
    # LayerNorm over features (population variance, eps=1e-5) then exact-erf GELU
    # (matches F.gelu default).
    mu = jnp.mean(x, axis=-1, keepdims=True)
    var = jnp.mean((x - mu) * (x - mu), axis=-1, keepdims=True)
    y = (x - mu) * jax.lax.rsqrt(var + 1e-5) * gamma + beta
    return 0.5 * y * (1.0 + jax.lax.erf(y * jnp.float32(1.0 / math.sqrt(2.0))))


def _proj_kernel(x_ref, g_ref, b_ref, wih_ref, bih_ref, gi_ref):
    """Hoisted preprocessing: LN -> GELU -> y @ [W_ih_fwd | W_ih_bwd] (+ biases)."""
    x = x_ref[...].astype(jnp.float32)
    y = _ln_gelu(x, g_ref[...], b_ref[...]).astype(MATMUL_DTYPE)
    proj = jnp.dot(y, wih_ref[...], preferred_element_type=jnp.float32) + bih_ref[...]
    h3 = proj.shape[-1] // 2
    gi_ref[0] = proj[:, :h3].astype(gi_ref.dtype)     # forward-direction gates
    gi_ref[1] = proj[:, h3:].astype(gi_ref.dtype)     # backward-direction gates


def _rec_kernel(gi_ref, wh_ref, bh_ref, out_ref, h_scr):
    """GRU recurrence: one direction x one TT-timestep block per program."""
    d = pl.program_id(0)          # 0 = forward, 1 = backward
    j = pl.program_id(1)          # time-block index within this direction

    @pl.when(j == 0)
    def _():
        h_scr[d] = jnp.zeros(h_scr.shape[1:], h_scr.dtype)

    TT, _, H = out_ref.shape
    wh = wh_ref[...]              # (H, 3H) bf16 recurrent weights (this direction)
    bh = bh_ref[...]              # (1, 3H) f32 bias

    rev = d * (TT - 1)            # within-block time reversal for the backward dir
    sgn = 1 - 2 * d

    def body(tt, h):
        idx = rev + sgn * tt
        gi = gi_ref[idx].astype(jnp.float32)                     # (B, 3H)
        gh = jnp.dot(h.astype(MATMUL_DTYPE), wh,
                     preferred_element_type=jnp.float32) + bh    # (B, 3H)
        # PyTorch gate order along the 3H axis: [r, z, n].
        # NOTE: keep H a multiple of 128 in real configs so these slices are
        # lane-aligned (demo shapes below are tiny, which is fine for the test).
        r = jax.nn.sigmoid(gi[:, 0:H] + gh[:, 0:H])
        z = jax.nn.sigmoid(gi[:, H:2 * H] + gh[:, H:2 * H])
        n = jnp.tanh(gi[:, 2 * H:3 * H] + r * gh[:, 2 * H:3 * H])
        h_new = (1.0 - z) * n + z * h
        out_ref[idx] = h_new.astype(out_ref.dtype)
        return h_new

    # Hidden state rides in vregs across the (capped-unroll) loop; scratch is touched
    # only once per block, purely for cross-grid-step persistence.
    # TODO(synk): pltpu.matmul_push_rhs could hold W_hh in MXU staging registers for
    # the whole block instead of re-pushing it every timestep.
    h_final = jax.lax.fori_loop(0, TT, body, h_scr[d], unroll=min(UNROLL, TT))
    h_scr[d] = h_final


# ----------------------------------- wrapper ----------------------------------------
def bidirectional_gru_pallas(x, params):
    """x: (B, T, D) batch-first.  Returns (B, T, 2*H) float32 (eval-mode dropout)."""
    B, T, D = x.shape
    H = params["whf"].shape[0]                  # weights stored transposed: (H, 3H)
    w_isz = np.dtype(MATMUL_DTYPE).itemsize
    gi_isz = np.dtype(GI_DTYPE).itemsize
    cap = _vmem_cap()
    budget = int(cap * 0.45)                    # per-stage working-set target

    gamma = params["gamma"].astype(jnp.float32)
    beta = params["beta"].astype(jnp.float32)
    w_ih = jnp.concatenate([params["wif"], params["wib"]], axis=1).astype(MATMUL_DTYPE)
    b_ih = jnp.concatenate([params["bif"], params["bib"]], axis=1).astype(jnp.float32)
    w_hh = jnp.stack([params["whf"], params["whb"]], axis=0).astype(MATMUL_DTYPE)
    b_hh = jnp.stack([params["bhf"], params["bhb"]], axis=0).astype(jnp.float32)

    resident = lambda: pl.BlockSpec(memory_space=pltpu.MemorySpace.VMEM)

    # ------------- Stage 1: LN + GELU + fused input projection (both directions) ----
    # TODO(synk): the time-major transpose of x could be folded into stage-1 BlockSpecs;
    # it is a single pass over the smallest tensor, so it is left to XLA here.
    rows = T * B
    x_rows = jnp.transpose(x, (1, 0, 2)).reshape(rows, D)        # time-major rows
    if rows <= 1024 and _proj_vmem_bytes(rows, D, H, gi_isz, w_isz) <= budget:
        RM = rows
    else:
        RM = next((rm for rm in (2048, 1024, 512, 256, 128)
                   if rm < rows and _proj_vmem_bytes(rm, D, H, gi_isz, w_isz) <= budget),
                  min(128, rows))
    rows_pad = ((rows + RM - 1) // RM) * RM
    if rows_pad != rows:
        x_rows = jnp.pad(x_rows, ((0, rows_pad - rows), (0, 0)))
    n_row_blocks = rows_pad // RM
    proj_need = _proj_vmem_bytes(RM, D, H, gi_isz, w_isz)

    gi = pl.pallas_call(
        _proj_kernel,
        out_shape=jax.ShapeDtypeStruct((2, rows_pad, 3 * H), GI_DTYPE),
        grid_spec=pltpu.PrefetchScalarGridSpec(
            num_scalar_prefetch=0,
            grid=(n_row_blocks,),
            in_specs=[
                pl.BlockSpec((RM, D), lambda i: (i, 0)),
                resident(), resident(),               # gamma, beta
                resident(), resident(),               # fused W_ih, b_ih
            ],
            out_specs=pl.BlockSpec((2, RM, 3 * H), lambda i: (0, i, 0)),
        ),
        compiler_params=pltpu.CompilerParams(
            dimension_semantics=("parallel",),
            vmem_limit_bytes=_vmem_limit(proj_need, cap)),
    )(x_rows, gamma, beta, w_ih, b_ih)

    gi = gi[:, :rows].reshape(2, T, B, 3 * H)         # no-op when rows_pad == rows

    # ------------- Stage 2: recurrence over a (direction, time-block) grid -----------
    TT = next((tt for tt in (64, 32, 16, 8, 4, 2, 1)
               if T % tt == 0 and _rec_vmem_bytes(tt, B, H, gi_isz, w_isz) <= budget), 1)
    nT = T // TT
    rec_need = _rec_vmem_bytes(TT, B, H, gi_isz, w_isz)

    def time_block(d, j):          # forward: block j ; backward: block nT-1-j
        return j + d * (nT - 1 - 2 * j)

    out = pl.pallas_call(
        _rec_kernel,
        out_shape=jax.ShapeDtypeStruct((2, T, B, H), jnp.float32),
        grid_spec=pltpu.PrefetchScalarGridSpec(
            num_scalar_prefetch=0,
            grid=(2, nT),
            in_specs=[
                pl.BlockSpec((None, TT, B, 3 * H),
                             lambda d, j: (d, time_block(d, j), 0, 0)),     # gi
                pl.BlockSpec((None, H, 3 * H), lambda d, j: (d, 0, 0)),     # W_hh (dir d)
                pl.BlockSpec((None, 1, 3 * H), lambda d, j: (d, 0, 0)),     # b_hh (dir d)
            ],
            out_specs=pl.BlockSpec((None, TT, B, H),
                                   lambda d, j: (d, time_block(d, j), 0, 0)),
            scratch_shapes=[pltpu.VMEM((2, B, H), jnp.float32)],  # carried h per dir
        ),
        compiler_params=pltpu.CompilerParams(
            # Direction axis is independent -> may split across the 2 TensorCores on
            # v7x; the time axis carries the recurrence through scratch.
            dimension_semantics=("parallel", "arbitrary"),
            vmem_limit_bytes=_vmem_limit(rec_need, cap)),
    )(gi, w_hh, b_hh)

    # (2, T, B, H) -> (B, T, 2H) batch-first: single fused transpose+reshape pass,
    # forward hidden in [..., :H], backward in [..., H:] (PyTorch layout).
    out = jnp.transpose(out, (2, 1, 0, 3)).reshape(B, T, 2 * H)
    # TODO(synk): nn.Dropout is active only in training mode; eval (identity) here.
    return out


# ------------------------------ params & reference ----------------------------------
def init_params(key, rnn_dim, hidden_size):
    """Deterministic synthetic parameters matching nn.GRU / nn.LayerNorm shapes."""
    k = 1.0 / math.sqrt(hidden_size)
    keys = jax.random.split(key, 8)
    u = lambda kk, shape: jax.random.uniform(kk, shape, jnp.float32, -k, k)
    # PyTorch stores W_ih as (3H, D), W_hh as (3H, H); we pass them transposed.
    return {
        "gamma": jnp.ones((1, rnn_dim), jnp.float32),
        "beta": jnp.zeros((1, rnn_dim), jnp.float32),
        "wif": u(keys[0], (rnn_dim, 3 * hidden_size)),
        "whf": u(keys[1], (hidden_size, 3 * hidden_size)),
        "bif": u(keys[2], (1, 3 * hidden_size)),
        "bhf": u(keys[3], (1, 3 * hidden_size)),
        "wib": u(keys[4], (rnn_dim, 3 * hidden_size)),
        "whb": u(keys[5], (hidden_size, 3 * hidden_size)),
        "bib": u(keys[6], (1, 3 * hidden_size)),
        "bhb": u(keys[7], (1, 3 * hidden_size)),
    }


def _reference(x, params):
    """Pure-JAX f32 reference (same math) used only for a sanity check."""
    H = params["whf"].shape[0]
    mu = jnp.mean(x, -1, keepdims=True)
    var = jnp.mean((x - mu) ** 2, -1, keepdims=True)
    y = (x - mu) / jnp.sqrt(var + 1e-5) * params["gamma"][0] + params["beta"][0]
    y = 0.5 * y * (1.0 + jax.lax.erf(y / jnp.sqrt(2.0)))

    def run_dir(xs, wi, wh, bi, bh):
        def step(h, xt):
            gi = xt @ wi + bi[0]
            gh = h @ wh + bh[0]
            r = jax.nn.sigmoid(gi[:, :H] + gh[:, :H])
            z = jax.nn.sigmoid(gi[:, H:2 * H] + gh[:, H:2 * H])
            n = jnp.tanh(gi[:, 2 * H:] + r * gh[:, 2 * H:])
            h_new = (1 - z) * n + z * h
            return h_new, h_new
        h0 = jnp.zeros((xs.shape[1], H), jnp.float32)
        _, hs = jax.lax.scan(step, h0, xs)
        return hs

    x_tm = jnp.transpose(y, (1, 0, 2))
    hf = run_dir(x_tm, params["wif"], params["whf"], params["bif"], params["bhf"])
    hb = run_dir(x_tm[::-1], params["wib"], params["whb"], params["bib"], params["bhb"])[::-1]
    return jnp.transpose(jnp.concatenate([hf, hb], -1), (1, 0, 2))


if __name__ == "__main__":
    B, T, D, H = 2, 8, 32, 32      # batch, seq, rnn_dim, hidden_size
    key = jax.random.PRNGKey(0)
    kx, kp = jax.random.split(key)
    x = jax.random.normal(kx, (B, T, D), jnp.float32)
    params = init_params(kp, D, H)

    out = jax.block_until_ready(bidirectional_gru_pallas(x, params))
    assert out.shape == (B, T, 2 * H), out.shape

    ref = jax.block_until_ready(_reference(x, params))
    # bf16 weights / gi intermediate -> slightly looser tolerance than the f32 version.
    np.testing.assert_allclose(np.asarray(out), np.asarray(ref), rtol=5e-2, atol=5e-2)

    print("KERNEL_OK")
</pallas_src>

<mosaic_0001>
module attributes {stable_mosaic.version = 11 : i64} {
  func.func @_proj_kernel(%arg0: i32, %arg1: memref<16x32xf32, #tpu.memory_space<vmem>>, %arg2: memref<1x32xf32, #tpu.memory_space<vmem>>, %arg3: memref<1x32xf32, #tpu.memory_space<vmem>>, %arg4: memref<32x192xbf16, #tpu.memory_space<vmem>>, %arg5: memref<1x192xf32, #tpu.memory_space<vmem>>, %arg6: memref<2x16x96xbf16, #tpu.memory_space<vmem>>) attributes {dimension_semantics = [#tpu.dimension_semantics<parallel>], iteration_bounds = array<i64: 1>, scalar_prefetch = 0 : i64, scratch_operands = 0 : i64, tpu.core_type = #tpu.core_type<tc>, window_params = [{transform_indices = @transform_0, window_bounds = array<i64: 16, 32>}, {pipeline_mode = #tpu.pipeline_mode<synchronous>, transform_indices = @transform_1, window_bounds = array<i64: 1, 32>}, {pipeline_mode = #tpu.pipeline_mode<synchronous>, transform_indices = @transform_2, window_bounds = array<i64: 1, 32>}, {pipeline_mode = #tpu.pipeline_mode<synchronous>, transform_indices = @transform_3, window_bounds = array<i64: 32, 192>}, {pipeline_mode = #tpu.pipeline_mode<synchronous>, transform_indices = @transform_4, window_bounds = array<i64: 1, 192>}, {transform_indices = @transform_5, window_bounds = array<i64: 2, 16, 96>}]} {
    %c0 = arith.constant 0 : index
    %c0_0 = arith.constant 0 : index
    %0 = vector.load %arg1[%c0, %c0_0] : memref<16x32xf32, #tpu.memory_space<vmem>>, vector<16x32xf32>
    %c0_1 = arith.constant 0 : index
    %c0_2 = arith.constant 0 : index
    %1 = vector.load %arg2[%c0_1, %c0_2] : memref<1x32xf32, #tpu.memory_space<vmem>>, vector<1x32xf32>
    %c0_3 = arith.constant 0 : index
    %c0_4 = arith.constant 0 : index
    %2 = vector.load %arg3[%c0_3, %c0_4] : memref<1x32xf32, #tpu.memory_space<vmem>>, vector<1x32xf32>
    %cst = arith.constant dense<0.000000e+00> : vector<16xf32>
    %3 = vector.multi_reduction <add>, %0, %cst [1] : vector<16x32xf32> to vector<16xf32>
    %4 = vector.shape_cast %3 : vector<16xf32> to vector<16x1xf32>
    %cst_5 = arith.constant 3.200000e+01 : f32
    %5 = vector.broadcast %cst_5 : f32 to vector<16x1xf32>
    %6 = arith.divf %4, %5 : vector<16x1xf32>
    %7 = vector.broadcast %6 : vector<16x1xf32> to vector<16x32xf32>
    %8 = arith.subf %0, %7 : vector<16x32xf32>
    %9 = vector.broadcast %6 : vector<16x1xf32> to vector<16x32xf32>
    %10 = arith.subf %0, %9 : vector<16x32xf32>
    %11 = arith.mulf %8, %10 : vector<16x32xf32>
    %cst_6 = arith.constant dense<0.000000e+00> : vector<16xf32>
    %12 = vector.multi_reduction <add>, %11, %cst_6 [1] : vector<16x32xf32> to vector<16xf32>
    %13 = vector.shape_cast %12 : vector<16xf32> to vector<16x1xf32>
    %cst_7 = arith.constant 3.200000e+01 : f32
    %14 = vector.broadcast %cst_7 : f32 to vector<16x1xf32>
    %15 = arith.divf %13, %14 : vector<16x1xf32>
    %16 = vector.broadcast %6 : vector<16x1xf32> to vector<16x32xf32>
    %17 = arith.subf %0, %16 : vector<16x32xf32>
    %cst_8 = arith.constant 9.99999974E-6 : f32
    %18 = vector.broadcast %cst_8 : f32 to vector<16x1xf32>
    %19 = arith.addf %15, %18 : vector<16x1xf32>
    %20 = math.rsqrt %19 : vector<16x1xf32>
    %21 = vector.broadcast %20 : vector<16x1xf32> to vector<16x32xf32>
    %22 = arith.mulf %17, %21 : vector<16x32xf32>
    %23 = vector.broadcast %1 : vector<1x32xf32> to vector<16x32xf32>
    %24 = arith.mulf %22, %23 : vector<16x32xf32>
    %25 = vector.broadcast %2 : vector<1x32xf32> to vector<16x32xf32>
    %26 = arith.addf %24, %25 : vector<16x32xf32>
    %cst_9 = arith.constant 5.000000e-01 : f32
    %27 = vector.broadcast %cst_9 : f32 to vector<16x32xf32>
    %28 = arith.mulf %27, %26 : vector<16x32xf32>
    %cst_10 = arith.constant 0.707106769 : f32
    %29 = vector.broadcast %cst_10 : f32 to vector<16x32xf32>
    %30 = arith.mulf %26, %29 : vector<16x32xf32>
    %31 = math.erf %30 : vector<16x32xf32>
    %cst_11 = arith.constant 1.000000e+00 : f32
    %32 = vector.broadcast %cst_11 : f32 to vector<16x32xf32>
    %33 = arith.addf %32, %31 : vector<16x32xf32>
    %34 = arith.mulf %28, %33 : vector<16x32xf32>
    %35 = arith.truncf %34 : vector<16x32xf32> to vector<16x32xbf16>
    %c0_12 = arith.constant 0 : index
    %c0_13 = arith.constant 0 : index
    %36 = vector.load %arg4[%c0_12, %c0_13] : memref<32x192xbf16, #tpu.memory_space<vmem>>, vector<32x192xbf16>
    %cst_14 = arith.constant dense<0.000000e+00> : vector<16x192xf32>
    %37 = tpu.matmul %35, %36, %cst_14 {dimension_numbers = #tpu.dot_dimension_numbers<[1], [0], [0], [1], [0, 0, 1, 1], [], []>} : vector<16x32xbf16>, vector<32x192xbf16>, vector<16x192xf32> -> vector<16x192xf32>
    %c0_15 = arith.constant 0 : index
    %c0_16 = arith.constant 0 : index
    %38 = vector.load %arg5[%c0_15, %c0_16] : memref<1x192xf32, #tpu.memory_space<vmem>>, vector<1x192xf32>
    %39 = vector.broadcast %38 : vector<1x192xf32> to vector<16x192xf32>
    %40 = arith.addf %37, %39 : vector<16x192xf32>
    %41 = vector.extract_strided_slice %40 {offsets = [0, 0], sizes = [16, 96], strides = [1, 1]} : vector<16x192xf32> to vector<16x96xf32>
    %42 = arith.truncf %41 : vector<16x96xf32> to vector<16x96xbf16>
    %c0_17 = arith.constant 0 : index
    %c0_18 = arith.constant 0 : index
    %c0_19 = arith.constant 0 : index
    %43 = vector.load %arg6[%c0_17, %c0_18, %c0_19] : memref<2x16x96xbf16, #tpu.memory_space<vmem>>, vector<1x16x96xbf16>
    %44 = vector.shape_cast %43 : vector<1x16x96xbf16> to vector<16x96xbf16>
    %45 = vector.shape_cast %42 : vector<16x96xbf16> to vector<1x16x96xbf16>
    tpu.vector_store %arg6[%c0_17, %c0_18, %c0_19], %45 {strides = array<i32>} : memref<2x16x96xbf16, #tpu.memory_space<vmem>>, vector<1x16x96xbf16>,
    %46 = vector.extract_strided_slice %40 {offsets = [0, 96], sizes = [16, 96], strides = [1, 1]} : vector<16x192xf32> to vector<16x96xf32>
    %47 = arith.truncf %46 : vector<16x96xf32> to vector<16x96xbf16>
    %c1 = arith.constant 1 : index
    %c0_20 = arith.constant 0 : index
    %c0_21 = arith.constant 0 : index
    %48 = vector.load %arg6[%c1, %c0_20, %c0_21] : memref<2x16x96xbf16, #tpu.memory_space<vmem>>, vector<1x16x96xbf16>
    %49 = vector.shape_cast %48 : vector<1x16x96xbf16> to vector<16x96xbf16>
    %50 = vector.shape_cast %47 : vector<16x96xbf16> to vector<1x16x96xbf16>
    tpu.vector_store %arg6[%c1, %c0_20, %c0_21], %50 {strides = array<i32>} : memref<2x16x96xbf16, #tpu.memory_space<vmem>>, vector<1x16x96xbf16>,
    return
  }
  func.func @transform_0(%arg0: i32) -> (i32, i32) {
    %c0_i32 = arith.constant 0 : i32
    %c0_i32_0 = arith.constant 0 : i32
    return %arg0, %c0_i32 : i32, i32
  }
  func.func @transform_1(%arg0: i32) -> (i32, i32) {
    %c0_i32 = arith.constant 0 : i32
    %c0_i32_0 = arith.constant 0 : i32
    %c0_i32_1 = arith.constant 0 : i32
    return %c0_i32, %c0_i32_0 : i32, i32
  }
  func.func @transform_2(%arg0: i32) -> (i32, i32) {
    %c0_i32 = arith.constant 0 : i32
    %c0_i32_0 = arith.constant 0 : i32
    %c0_i32_1 = arith.constant 0 : i32
    return %c0_i32, %c0_i32_0 : i32, i32
  }
  func.func @transform_3(%arg0: i32) -> (i32, i32) {
    %c0_i32 = arith.constant 0 : i32
    %c0_i32_0 = arith.constant 0 : i32
    %c0_i32_1 = arith.constant 0 : i32
    return %c0_i32, %c0_i32_0 : i32, i32
  }
  func.func @transform_4(%arg0: i32) -> (i32, i32) {
    %c0_i32 = arith.constant 0 : i32
    %c0_i32_0 = arith.constant 0 : i32
    %c0_i32_1 = arith.constant 0 : i32
    return %c0_i32, %c0_i32_0 : i32, i32
  }
  func.func @transform_5(%arg0: i32) -> (i32, i32, i32) {
    %c0_i32 = arith.constant 0 : i32
    %c0_i32_0 = arith.constant 0 : i32
    %c0_i32_1 = arith.constant 0 : i32
    return %c0_i32, %arg0, %c0_i32_0 : i32, i32, i32
  }
}

</mosaic_0001>

<llo_original>
// kernel: tpu_custom_call.1
$region0: #{tpu_custom_call.1}
  #allocation0 [shape = 'u32[]', space=smem, size = 0x4, offset = 0x4, fixed_abs, tag = 'smem constant byte address 0x4 - core index']
  #allocation1 [shape = 'u32[144,128]{1,0:T(1,128)}', space=vmem, size = 0x12000, scoped, tag = 'internal scratch']
  %s0 = inlined_call_operand.hbm [shape: f32[16,32], index: 0, kind: input, shape index: {}]
  %s1 = inlined_call_operand.vmem [shape: f32[1,32], index: 1, kind: input, shape index: {}]
  %s2 = inlined_call_operand.vmem [shape: f32[1,32], index: 2, kind: input, shape index: {}]
  %s3 = inlined_call_operand.hbm [shape: bf16[32,192], index: 3, kind: input, shape index: {}]
  %s4 = inlined_call_operand.vmem [shape: f32[1,192], index: 4, kind: input, shape index: {}]
  %s5 = inlined_call_operand.hbm [shape: bf16[2,16,96], index: 5, kind: output, shape index: {}]
  %s6 = sld [smem:[#allocation0]]
  $region38: #{tpu_custom_call.1} parent=0
    _
  %s8 = ssub.s32 1, %s6
  %s9 = scalar_select 0, %s8, %s6
  $region1: #{tpu_custom_call.1} parent=0
    #allocation2 [shape = 'u8[8192]{0}', space=vmem, size = 0x2000, scoped, tag = 'input window, operand 0, single buffered']
    #allocation3 [shape = 's32[1]{0}', space=sflag, size = 0x4, scoped, tag = 'scoped memory for tpu_custom_call.1']
    #allocation4 [shape = 's32[1]{0}', space=sflag, size = 0x4, scoped, tag = 'scoped memory for tpu_custom_call.1']
    #allocation5 [shape = 'u8[16384]{0}', space=vmem, size = 0x4000, scoped, tag = 'input window, operand 3, single buffered']
    #allocation6 [shape = 's32[1]{0}', space=sflag, size = 0x4, scoped, tag = 'scoped memory for tpu_custom_call.1']
    #allocation7 [shape = 'u8[8192]{0}', space=vmem, size = 0x2000, scoped, tag = 'output window, operand 0, single buffered']
    %10 = vsyncpa [#allocation3], 0
    %11 = vsyncpa [#allocation6], 0
    %12 = vsyncpa [#allocation4], 0
    // Predicated region
    $region2: #{tpu_custom_call.1} parent=1 // pred_check
      _
    $region3: #{tpu_custom_call.1} parent=1 // pred_check_branch
      %14 = sbr.rel (0) target = $region5
    $region4: #{tpu_custom_call.1} parent=1 // pred_region
      %s16 = ssub.s32 256, 256
      %17 = vsyncadd [#allocation3], %s16
      %s18 = sshll.u32 [#allocation2], 4
      %s19 = int_to_ptr.vmem [resolvable:$true] %s18
      %24 = dma.hbm_to_vmem [thread:$0]  %s0, 256, %s19, [#allocation3], 128, 128, 8
    $region5: #{tpu_custom_call.1} parent=1 // pred_fallthru
      _
    // Predicated region
    $region6: #{tpu_custom_call.1} parent=1 // pred_check
      _
    $region7: #{tpu_custom_call.1} parent=1 // pred_check_branch
      %26 = sbr.rel (0) target = $region9
    $region8: #{tpu_custom_call.1} parent=1 // pred_region
      _
    $region9: #{tpu_custom_call.1} parent=1 // pred_fallthru
      _
    // Predicated region
    $region10: #{tpu_custom_call.1} parent=1 // pred_check
      _
    $region11: #{tpu_custom_call.1} parent=1 // pred_check_branch
      %28 = sbr.rel (0) target = $region13
    $region12: #{tpu_custom_call.1} parent=1 // pred_region
      _
    $region13: #{tpu_custom_call.1} parent=1 // pred_fallthru
      _
    // Predicated region
    $region14: #{tpu_custom_call.1} parent=1 // pred_check
      _
    $region15: #{tpu_custom_call.1} parent=1 // pred_check_branch
      %30 = sbr.rel (0) target = $region17
    $region16: #{tpu_custom_call.1} parent=1 // pred_region
      %s32 = ssub.s32 512, 512
      %33 = vsyncadd [#allocation6], %s32
      %s34 = sshll.u32 [#allocation5], 4
      %s35 = int_to_ptr.vmem [resolvable:$true] %s34
      %40 = dma.hbm_to_vmem [thread:$0]  %s3, 512, %s35, [#allocation6], 128, 128, 8
    $region17: #{tpu_custom_call.1} parent=1 // pred_fallthru
      _
    // Predicated region
    $region18: #{tpu_custom_call.1} parent=1 // pred_check
      _
    $region19: #{tpu_custom_call.1} parent=1 // pred_check_branch
      %42 = sbr.rel (0) target = $region21
    $region20: #{tpu_custom_call.1} parent=1 // pred_region
      _
    $region21: #{tpu_custom_call.1} parent=1 // pred_fallthru
      _
    // Predicated region
    $region22: #{tpu_custom_call.1} parent=1 // pred_check
      _
    $region23: #{tpu_custom_call.1} parent=1 // pred_check_branch
      %44 = sbr.rel (0) target = $region25
    $region24: #{tpu_custom_call.1} parent=1 // pred_region
      %45 = dma.done [#allocation3], 256
    $region25: #{tpu_custom_call.1} parent=1 // pred_fallthru
      _
    // Predicated region
    $region26: #{tpu_custom_call.1} parent=1 // pred_check
      _
    $region27: #{tpu_custom_call.1} parent=1 // pred_check_branch
      %47 = sbr.rel (0) target = $region29
    $region28: #{tpu_custom_call.1} parent=1 // pred_region
      %48 = dma.done [#allocation6], 512
    $region29: #{tpu_custom_call.1} parent=1 // pred_fallthru
      _
    %v50 = vld [vmem:[#allocation2] sm:$0xff]
    %v51 = vld [vmem:[#allocation2 + $0x8] sm:$0xff]
    %v52 = vld [vmem:[%s1] sm:$0x1]
    %v53 = vld [vmem:[%s2] sm:$0x1]
    %vm54 = vcmask 261120
    %v55 = vsel %vm54, %v50, 0.0
    %56 = vadd.xlane.f32.xlu0 %v55
    %v57 = vpop.xlane.xlu0 %56
    %v58 = vsel %vm54, %v51, 0.0
    %59 = vadd.xlane.f32.xlu0 %v58
    %v60 = vpop.xlane.xlu0 %59
    %v61 = vrcp.pop 32.0
    %v62 = vmul.f32 %v57, %v61
    %v63 = vmul.f32 %v60, %v61
    %v64 = vsub.f32 %v50, %v62
    %v65 = vsub.f32 %v51, %v63
    %v66 = vmul.f32 %v64, %v64
    %v67 = vmul.f32 %v65, %v65
    %v68 = vsel %vm54, %v66, 0.0
    %69 = vadd.xlane.f32.xlu0 %v68
    %v70 = vpop.xlane.xlu0 %69
    %v71 = vsel %vm54, %v67, 0.0
    %72 = vadd.xlane.f32.xlu0 %v71
    %v73 = vpop.xlane.xlu0 %72
    %v74 = vmul.f32 %v70, %v61
    %v75 = vmul.f32 %v73, %v61
    %v76 = vadd.f32 %v74, 1e-05
    %v77 = vadd.f32 %v75, 1e-05
    %v78 = vrsqrt.pop %v76
    %v79 = vrsqrt.pop %v77
    %v80 = vmul.f32 %v64, %v78
    %v81 = vmul.f32 %v65, %v79
    %v83 = vlaneseq
    %v84 = vshrl.u32 %v83, 7
    %v85 = vsub.s32 0, %v84
    %v86 = vrot.slane %v52, %v85
    %v88 = vmul.f32 %v80, %v86
    %v89 = vmul.f32 %v81, %v86
    %v91 = vlaneseq
    %v92 = vshrl.u32 %v91, 7
    %v93 = vsub.s32 0, %v92
    %v94 = vrot.slane %v53, %v93
    %v96 = vadd.f32 %v88, %v94
    %v97 = vadd.f32 %v89, %v94
    %v98 = vmul.f32 %v96, 0.5
    %v99 = vmul.f32 %v97, 0.5
    %v100 = vmul.f32 %v96, 0.70710677
    %v101 = vmul.f32 %v97, 0.70710677
    %v102 = verf.f32.pop %v100
    %v103 = verf.f32.pop %v101
    %v104 = vadd.f32 %v102, 1.0
    %v105 = vadd.f32 %v103, 1.0
    %v106 = vmul.f32 %v98, %v104
    %v107 = vmul.f32 %v99, %v105
    %v108 = vpack.c.bf16 %v107, %v106
    %v109 = vld [vmem:[#allocation5] sm:$0xff]
    %v110 = vld [vmem:[#allocation5 + $0x8] sm:$0xff]
    %v111 = vld [vmem:[#allocation5 + $0x10] sm:$0xff]
    %v112 = vld [vmem:[#allocation5 + $0x18] sm:$0xff]
    %v113 = vld [vmem:[%s4] sm:$0x3]
    %v115 = vlaneseq
    %v116 = vshrl.u32 %v115, 7
    %v117 = vsub.s32 0, %v116
    %v118 = vrot.slane %v113, %v117
    %v119 = vlaneseq
    %v120 = vshrl.u32 %v119, 7
    %v121 = vsub.s32 1, %v120
    %v122 = vrot.slane %v113, %v121
    %v129 = vunpack.c.l.b16 %v109
    %v130 = vunpack.c.h.b16 %v109
    %v131 = vunpack.c.l.b16 %v110
    %v132 = vunpack.c.h.b16 %v110
    %v133 = vunpack.c.l.b16 %v111
    %v134 = vunpack.c.h.b16 %v111
    %v135 = vunpack.c.l.b16 %v112
    %v136 = vunpack.c.h.b16 %v112
    %v137 = vpack.c.b16 %v131, %v129
    %v138 = vpack.c.b16 %v132, %v130
    %v139 = vpack.c.b16 %v135, %v133
    %v140 = vpack.c.b16 %v136, %v134
    %v146 = vsel %vm54, %v108, 0
    %148 = vmatprep.subr.bf16.mxu0 %v138
    %149 = vmatpush1.bf16.msra.mxu0 %v137
    %150 = vmatprep.subr.bf16.mxu0 %v140
    %151 = vmatpush1.bf16.msra.mxu0 %v139
    %152 = vmatprep.subr.bf16.mxu0 0
    %153 = vmatpush1.bf16.msra.mxu0 0
    %154 = vmatprep.subr.bf16.mxu0 0
    %155 = vmatpush1.bf16.msra.mxu0 0
    %156 = vmatprep.subr.bf16.mxu0 0
    %157 = vmatpush1.bf16.msra.mxu0 0
    %158 = vmatprep.subr.bf16.mxu0 0
    %159 = vmatpush1.bf16.msra.mxu0 0
    %160 = vmatprep.subr.bf16.mxu0 0
    %161 = vmatpush1.bf16.msra.mxu0 0
    %162 = vmatprep.subr.bf16.mxu0 0
    %163 = vmatpush1.bf16.msra.mxu0 0
    %164 = vmatprep.subr.bf16.mxu0 0
    %165 = vmatpush1.bf16.msra.mxu0 0
    %166 = vmatprep.subr.bf16.mxu0 0
    %167 = vmatpush1.bf16.msra.mxu0 0
    %168 = vmatprep.subr.bf16.mxu0 0
    %169 = vmatpush1.bf16.msra.mxu0 0
    %170 = vmatprep.subr.bf16.mxu0 0
    %171 = vmatpush1.bf16.msra.mxu0 0
    %172 = vmatprep.subr.bf16.mxu0 0
    %173 = vmatpush1.bf16.msra.mxu0 0
    %174 = vmatprep.subr.bf16.mxu0 0
    %175 = vmatpush1.bf16.msra.mxu0 0
    %176 = vmatprep.subr.bf16.mxu0 0
    %177 = vmatpush1.bf16.msra.mxu0 0
    %178 = vmatprep.subr.bf16.mxu0 0
    %179 = vmatpush1.bf16.msra.mxu0 0
    %180 = vmatprep.mubr.bf16.mxu0 0
    %181 = vmatmul.mubr.bf16.gmra.mrb[0].mxu0 %v146
    %v182 = vpop.f32.mrb[0].mxu0
    %v183 = vadd.f32 %v118, %v182
    %v184 = vpop.f32.mrb[0].mxu0
    %v185 = vadd.f32 %v122, %v184
    %v186 = vpop.f32.mrb[0].mxu0
    %v187 = vadd.f32 %v118, %v186
    %v188 = vpop.f32.mrb[0].mxu0
    %v189 = vadd.f32 %v122, %v188
    %190 = vdwg.mxu0
    %v191 = vpack.c.bf16 %v187, %v183
    %v193 = vunpack.c.l.b16 %v191
    %v194 = vunpack.c.h.b16 %v191
    %v195 = vpack.c.b16 %v193, %v193
    %v196 = vpack.c.b16 %v194, %v194
    %vm199 = vcmask 781312
    %200 = vst.msk [vmem:[#allocation7] sm:$0xf] %vm199, %v195
    %201 = vst.msk [vmem:[#allocation7 + $0x4] sm:$0xf] %vm199, %v196
    %v202 = vpack.c.bf16 %v189, %v185
    %v204 = vunpack.c.l.b16 %v202
    %v205 = vunpack.c.h.b16 %v202
    %v206 = vpack.c.b16 %v204, %v193
    %v207 = vpack.c.b16 %v205, %v194
    %208 = vrot.lane.b32.xlu0 %v206, 32
    %v209 = vpop.permute.xlu0 %208
    %210 = vrot.lane.b32.xlu0 %v207, 32
    %v211 = vpop.permute.xlu0 %210
    %v212 = vrot.slane %v209, 4
    %v213 = vrot.slane %v211, 4
    %vm214 = vcmask 261120
    %v215 = vsel %vm214, %v209, %v212
    %v216 = vsel %vm214, %v211, %v213
    %s219 = scalar_lea.vmem [#allocation7], 8
    %220 = vst.msk [vmem:[%s219] sm:$0xf] %vm199, %v215
    %221 = vst.msk [vmem:[%s219 + $0x4] sm:$0xf] %vm199, %v216
    // Predicated region
    $region30: #{tpu_custom_call.1} parent=1 // pred_check
      _
    $region31: #{tpu_custom_call.1} parent=1 // pred_check_branch
      %223 = sbr.rel (0) target = $region33
    $region32: #{tpu_custom_call.1} parent=1 // pred_region
      %s225 = ssub.s32 256, 256
      %226 = vsyncadd [#allocation4], %s225
      %s227 = sshll.u32 [#allocation7], 4
      %s228 = int_to_ptr.vmem [resolvable:$true] %s227
      %233 = dma.vmem_to_hbm [thread:$0]  %s228, 256, %s5, [#allocation4], 64, 64, 4
    $region33: #{tpu_custom_call.1} parent=1 // pred_fallthru
      _
    // Predicated region
    $region34: #{tpu_custom_call.1} parent=1 // pred_check
      _
    $region35: #{tpu_custom_call.1} parent=1 // pred_check_branch
      %235 = sbr.rel (0) target = $region37
    $region36: #{tpu_custom_call.1} parent=1 // pred_region
      %236 = dma.done [#allocation4], 256
    $region37: #{tpu_custom_call.1} parent=1 // pred_fallthru
      _
    %237 = vsyncpa [#allocation3], 1
    %238 = vsyncpa [#allocation6], 1
    %239 = vsyncpa [#allocation4], 1

</llo_original>
